<compile_context>
chip_gen: v5e
topology: v5e:2x2
jax: 0.10.0
libtpu: 0.0.40
codegen_flags: <defaults>
</compile_context>

<pallas_src>
import functools
import math

import jax
import jax.numpy as jnp
from jax import lax
from jax.experimental import pallas as pl
from jax.experimental.pallas import tpu as pltpu

N_PHASES = 4
_LOG_2PI = math.log(2.0 * math.pi)
_LANES = 128
_SUBLANES = 8
_CHUNK = 32  # rows per inner chunk (4 f32 vregs) -- keeps temporaries in-register


def _round_up(x, m):
    return ((x + m - 1) // m) * m


def _gmm_loss_kernel(params_ref, u_ref, out_ref, *, tm, chunk):
    """params_ref: SMEM (3, n_phases) f32, rows = [I_k, s_k, c_k] with
         lp_k(u) = c_k - ((u - I_k) * s_k)^2
       u_ref:   VMEM (tm, 128) f32 data tile
       out_ref: VMEM (1, 8, 128) f32 lane-dense partial-sum accumulator
                (one resident block per 'parallel' grid slice)."""
    i = pl.program_id(1)

    @pl.when(i == 0)
    def _():
        out_ref[...] = jnp.zeros_like(out_ref)

    n_phases = params_ref.shape[1]
    # Hoist all SMEM scalar reads once (broadcasts are not CSE'd by JAX).
    I_k = [params_ref[0, k] for k in range(n_phases)]
    s_k = [params_ref[1, k] for k in range(n_phases)]
    c_k = [params_ref[2, k] for k in range(n_phases)]

    n_chunks = tm // chunk

    def chunk_fold(c, acc):
        start = c * chunk
        if n_chunks > 1:
            start = pl.multiple_of(start, chunk)
        u = u_ref[pl.ds(start, chunk), :]  # (chunk, 128) f32

        # All lp_k stay live (chunk is only a few vregs) -> no recompute in the
        # exp pass and no VMEM spills.
        lp = []
        for k in range(n_phases):
            z = (u - I_k[k]) * s_k[k]
            lp.append(c_k[k] - z * z)

        m = lp[0]
        for k in range(1, n_phases):
            m = jnp.maximum(m, lp[k])
        s = jnp.exp(lp[0] - m)
        for k in range(1, n_phases):
            s = s + jnp.exp(lp[k] - m)
        lse = m + jnp.log(s)  # (chunk, 128) = log p(u_m) per point

        # Fold the chunk into a single (8,128) vreg of partial sums.
        for r in range(chunk // _SUBLANES):
            acc = acc + lse[r * _SUBLANES:(r + 1) * _SUBLANES, :]
        return acc

    acc0 = jnp.zeros((_SUBLANES, _LANES), jnp.float32)
    if n_chunks == 1:
        acc = chunk_fold(0, acc0)
    else:
        acc = lax.fori_loop(0, n_chunks, chunk_fold, acc0,
                            unroll=min(8, n_chunks))

    out_ref[...] += acc[None]


def gmm_loss(u, I, sigma_n, W, *, tm=4096, n_parallel=2):
    """Pallas implementation of GMM.forward(u) for 1-D u (any length)."""
    u = u.reshape(-1).astype(jnp.float32)
    M = u.shape[0]

    # Fold per-component constants on the host (removes per-element divides
    # and per-step scalar logs from the kernel).
    I_f = I.astype(jnp.float32)
    sigma = sigma_n.astype(jnp.float32)
    log_w = jax.nn.log_softmax(W.astype(jnp.float32))
    s_fold = (1.0 / sigma) * jnp.float32(math.sqrt(0.5))           # 1/(sigma*sqrt(2))
    c_fold = log_w - jnp.log(sigma) - jnp.float32(0.5 * _LOG_2PI)  # additive constant
    params = jnp.stack([I_f, s_fold, c_fold], axis=0)              # (3, n_phases)

    rows = pl.cdiv(M, _LANES)
    # Leading 'parallel' axis (2 -> both TCs on v7x; harmless on v5e/v6e) when
    # there is enough work to split.
    P = max(1, min(n_parallel, rows // _SUBLANES))
    rows_per_slice = pl.cdiv(rows, P)

    tm_eff = min(tm, _round_up(rows_per_slice, _SUBLANES))
    if tm_eff > _CHUNK:
        tm_eff = _round_up(tm_eff, _CHUNK)
    steps = pl.cdiv(rows_per_slice, tm_eff)
    # Prefer >=2 steps per slice so each TensorCore's pipeline can prefetch.
    if steps < 2 and tm_eff >= 2 * _CHUNK:
        tm_eff = _round_up(pl.cdiv(rows_per_slice, 2), _CHUNK)
        steps = pl.cdiv(rows_per_slice, tm_eff)
    chunk = min(_CHUNK, tm_eff)

    padded_rows = P * steps * tm_eff
    padded = padded_rows * _LANES
    n_pad = padded - M

    u_pad = jnp.pad(u, (0, n_pad)) if n_pad else u
    u2 = u_pad.reshape(padded_rows, _LANES)

    kernel = functools.partial(_gmm_loss_kernel, tm=tm_eff, chunk=chunk)

    cost = pl.CostEstimate(
        flops=int(25 * padded),
        transcendentals=int(5 * padded),
        bytes_accessed=int(4 * padded),
    )

    partials = pl.pallas_call(
        kernel,
        out_shape=jax.ShapeDtypeStruct((P, _SUBLANES, _LANES), jnp.float32),
        grid=(P, steps),
        in_specs=[
            pl.BlockSpec(memory_space=pltpu.MemorySpace.SMEM),                # params
            pl.BlockSpec((tm_eff, _LANES), lambda p, i: (p * steps + i, 0)),  # data
        ],
        out_specs=pl.BlockSpec((1, _SUBLANES, _LANES), lambda p, i: (p, 0, 0)),
        compiler_params=pltpu.CompilerParams(
            dimension_semantics=("parallel", "arbitrary")),
        cost_estimate=cost,
    )(params, u2)

    total = jnp.sum(partials)
    if n_pad:
        # Padded elements are exact zeros; each contributes
        #   lse0 = logsumexp_k(c_k - (I_k * s_k)^2)
        # computed here from the SAME folded constants (and same max-shifted
        # logsumexp) as the kernel, so the correction matches to f32 precision.
        lp0 = c_fold - (I_f * s_fold) ** 2
        m0 = jnp.max(lp0)
        lse0 = m0 + jnp.log(jnp.sum(jnp.exp(lp0 - m0)))
        total = total - jnp.float32(n_pad) * lse0

    return -total / M


def gmm_loss_ref(u, I, sigma_n, W):
    """Pure-JAX reference (mirrors the PyTorch module)."""
    log_w = jax.nn.log_softmax(W)
    log_p = (-jnp.log(sigma_n)[:, None]
             - 0.5 * _LOG_2PI
             - 0.5 * ((u[None, :] - I[:, None]) / sigma_n[:, None]) ** 2)
    lse = jax.scipy.special.logsumexp(log_w[:, None] + log_p, axis=0)
    return -jnp.sum(lse) / u.shape[0]


if __name__ == "__main__":
    key = jax.random.PRNGKey(0)

    # Deterministic parameter init, exactly as GMM.reset_params():
    I = jnp.linspace(0.0, 1.0, N_PHASES).astype(jnp.float32)
    sigma_n = jnp.ones((N_PHASES,), jnp.float32) * 0.1
    W = jnp.zeros((N_PHASES,), jnp.float32)

    # Case 1: lane-aligned M (no padding path, 2-slice parallel grid).
    M1 = 2048
    u1 = jax.random.uniform(key, (M1,), dtype=jnp.float32)
    loss1 = gmm_loss(u1, I, sigma_n, W)
    jax.block_until_ready(loss1)
    ref1 = gmm_loss_ref(u1, I, sigma_n, W)
    assert jnp.allclose(loss1, ref1, rtol=1e-5, atol=1e-5), (loss1, ref1)

    # Case 2: ragged M (exercises the host-side pad correction).
    M2 = 1000
    u2 = jax.random.uniform(jax.random.PRNGKey(1), (M2,), dtype=jnp.float32)
    loss2 = gmm_loss(u2, I, sigma_n, W)
    jax.block_until_ready(loss2)
    ref2 = gmm_loss_ref(u2, I, sigma_n, W)
    assert jnp.allclose(loss2, ref2, rtol=1e-5, atol=1e-5), (loss2, ref2)

    # Case 3: larger ragged M (exercises the chunked fori_loop, multi-step
    # grid, 2-core split, and pad correction together).
    M3 = 300_000
    u3 = jax.random.uniform(jax.random.PRNGKey(2), (M3,), dtype=jnp.float32)
    loss3 = gmm_loss(u3, I, sigma_n, W)
    jax.block_until_ready(loss3)
    ref3 = gmm_loss_ref(u3, I, sigma_n, W)
    assert jnp.allclose(loss3, ref3, rtol=1e-5, atol=1e-5), (loss3, ref3)

    print("KERNEL_OK")
</pallas_src>

<mosaic_0001>
module attributes {stable_mosaic.version = 11 : i64} {
  func.func @_gmm_loss_kernel(%arg0: i32, %arg1: i32, %arg2: memref<3x4xf32, #tpu.memory_space<smem>>, %arg3: memref<8x128xf32, #tpu.memory_space<vmem>>, %arg4: memref<1x8x128xf32, #tpu.memory_space<vmem>>) attributes {dimension_semantics = [#tpu.dimension_semantics<parallel>, #tpu.dimension_semantics<arbitrary>], iteration_bounds = array<i64: 2, 1>, scalar_prefetch = 0 : i64, scratch_operands = 0 : i64, tpu.core_type = #tpu.core_type<tc>, window_params = [{transform_indices = @transform_0, window_bounds = array<i64: 3, 4>}, {transform_indices = @transform_1, window_bounds = array<i64: 8, 128>}, {transform_indices = @transform_2, window_bounds = array<i64: 1, 8, 128>}]} {
    %c0_i32 = arith.constant 0 : i32
    %0 = arith.cmpi eq, %arg1, %c0_i32 : i32
    %1 = arith.extui %0 : i1 to i32
    %c0_i32_0 = arith.constant 0 : i32
    %2 = arith.cmpi ne, %1, %c0_i32_0 : i32
    scf.if %2 {
      %cst_29 = arith.constant 0.000000e+00 : f32
      %66 = vector.broadcast %cst_29 : f32 to vector<1x8x128xf32>
      %c0_30 = arith.constant 0 : index
      %c0_31 = arith.constant 0 : index
      %c0_32 = arith.constant 0 : index
      %67 = vector.load %arg4[%c0_30, %c0_31, %c0_32] : memref<1x8x128xf32, #tpu.memory_space<vmem>>, vector<1x8x128xf32>
      tpu.vector_store %arg4[%c0_30, %c0_31, %c0_32], %66 {strides = array<i32>} : memref<1x8x128xf32, #tpu.memory_space<vmem>>, vector<1x8x128xf32>,
    } else {
    }
    %c0 = arith.constant 0 : index
    %c0_1 = arith.constant 0 : index
    %3 = memref.load %arg2[%c0, %c0_1] : memref<3x4xf32, #tpu.memory_space<smem>>
    %c0_2 = arith.constant 0 : index
    %c1 = arith.constant 1 : index
    %4 = memref.load %arg2[%c0_2, %c1] : memref<3x4xf32, #tpu.memory_space<smem>>
    %c0_3 = arith.constant 0 : index
    %c2 = arith.constant 2 : index
    %5 = memref.load %arg2[%c0_3, %c2] : memref<3x4xf32, #tpu.memory_space<smem>>
    %c0_4 = arith.constant 0 : index
    %c3 = arith.constant 3 : index
    %6 = memref.load %arg2[%c0_4, %c3] : memref<3x4xf32, #tpu.memory_space<smem>>
    %c1_5 = arith.constant 1 : index
    %c0_6 = arith.constant 0 : index
    %7 = memref.load %arg2[%c1_5, %c0_6] : memref<3x4xf32, #tpu.memory_space<smem>>
    %c1_7 = arith.constant 1 : index
    %c1_8 = arith.constant 1 : index
    %8 = memref.load %arg2[%c1_7, %c1_8] : memref<3x4xf32, #tpu.memory_space<smem>>
    %c1_9 = arith.constant 1 : index
    %c2_10 = arith.constant 2 : index
    %9 = memref.load %arg2[%c1_9, %c2_10] : memref<3x4xf32, #tpu.memory_space<smem>>
    %c1_11 = arith.constant 1 : index
    %c3_12 = arith.constant 3 : index
    %10 = memref.load %arg2[%c1_11, %c3_12] : memref<3x4xf32, #tpu.memory_space<smem>>
    %c2_13 = arith.constant 2 : index
    %c0_14 = arith.constant 0 : index
    %11 = memref.load %arg2[%c2_13, %c0_14] : memref<3x4xf32, #tpu.memory_space<smem>>
    %c2_15 = arith.constant 2 : index
    %c1_16 = arith.constant 1 : index
    %12 = memref.load %arg2[%c2_15, %c1_16] : memref<3x4xf32, #tpu.memory_space<smem>>
    %c2_17 = arith.constant 2 : index
    %c2_18 = arith.constant 2 : index
    %13 = memref.load %arg2[%c2_17, %c2_18] : memref<3x4xf32, #tpu.memory_space<smem>>
    %c2_19 = arith.constant 2 : index
    %c3_20 = arith.constant 3 : index
    %14 = memref.load %arg2[%c2_19, %c3_20] : memref<3x4xf32, #tpu.memory_space<smem>>
    %cst = arith.constant 0.000000e+00 : f32
    %15 = vector.broadcast %cst : f32 to vector<8x128xf32>
    %c0_21 = arith.constant 0 : index
    %c0_22 = arith.constant 0 : index
    %16 = vector.load %arg3[%c0_21, %c0_22] : memref<8x128xf32, #tpu.memory_space<vmem>>, vector<8x128xf32>
    %17 = vector.broadcast %3 : f32 to vector<8x128xf32>
    %18 = arith.subf %16, %17 : vector<8x128xf32>
    %19 = vector.broadcast %7 : f32 to vector<8x128xf32>
    %20 = arith.mulf %18, %19 : vector<8x128xf32>
    %21 = arith.mulf %20, %20 : vector<8x128xf32>
    %22 = vector.broadcast %11 : f32 to vector<8x128xf32>
    %23 = arith.subf %22, %21 : vector<8x128xf32>
    %24 = vector.broadcast %4 : f32 to vector<8x128xf32>
    %25 = arith.subf %16, %24 : vector<8x128xf32>
    %26 = vector.broadcast %8 : f32 to vector<8x128xf32>
    %27 = arith.mulf %25, %26 : vector<8x128xf32>
    %28 = arith.mulf %27, %27 : vector<8x128xf32>
    %29 = vector.broadcast %12 : f32 to vector<8x128xf32>
    %30 = arith.subf %29, %28 : vector<8x128xf32>
    %31 = vector.broadcast %5 : f32 to vector<8x128xf32>
    %32 = arith.subf %16, %31 : vector<8x128xf32>
    %33 = vector.broadcast %9 : f32 to vector<8x128xf32>
    %34 = arith.mulf %32, %33 : vector<8x128xf32>
    %35 = arith.mulf %34, %34 : vector<8x128xf32>
    %36 = vector.broadcast %13 : f32 to vector<8x128xf32>
    %37 = arith.subf %36, %35 : vector<8x128xf32>
    %38 = vector.broadcast %6 : f32 to vector<8x128xf32>
    %39 = arith.subf %16, %38 : vector<8x128xf32>
    %40 = vector.broadcast %10 : f32 to vector<8x128xf32>
    %41 = arith.mulf %39, %40 : vector<8x128xf32>
    %42 = arith.mulf %41, %41 : vector<8x128xf32>
    %43 = vector.broadcast %14 : f32 to vector<8x128xf32>
    %44 = arith.subf %43, %42 : vector<8x128xf32>
    %45 = arith.maximumf %23, %30 : vector<8x128xf32>
    %46 = arith.maximumf %45, %37 : vector<8x128xf32>
    %47 = arith.maximumf %46, %44 : vector<8x128xf32>
    %48 = arith.subf %23, %47 : vector<8x128xf32>
    %49 = math.exp %48 : vector<8x128xf32>
    %50 = arith.subf %30, %47 : vector<8x128xf32>
    %51 = math.exp %50 : vector<8x128xf32>
    %52 = arith.addf %49, %51 : vector<8x128xf32>
    %53 = arith.subf %37, %47 : vector<8x128xf32>
    %54 = math.exp %53 : vector<8x128xf32>
    %55 = arith.addf %52, %54 : vector<8x128xf32>
    %56 = arith.subf %44, %47 : vector<8x128xf32>
    %57 = math.exp %56 : vector<8x128xf32>
    %58 = arith.addf %55, %57 : vector<8x128xf32>
    %59 = math.log %58 : vector<8x128xf32>
    %60 = arith.addf %47, %59 : vector<8x128xf32>
    %61 = arith.addf %15, %60 : vector<8x128xf32>
    %c0_23 = arith.constant 0 : index
    %c0_24 = arith.constant 0 : index
    %c0_25 = arith.constant 0 : index
    %62 = vector.load %arg4[%c0_23, %c0_24, %c0_25] : memref<1x8x128xf32, #tpu.memory_space<vmem>>, vector<1x8x128xf32>
    %63 = vector.shape_cast %61 : vector<8x128xf32> to vector<1x8x128xf32>
    %64 = arith.addf %62, %63 : vector<1x8x128xf32>
    %c0_26 = arith.constant 0 : index
    %c0_27 = arith.constant 0 : index
    %c0_28 = arith.constant 0 : index
    %65 = vector.load %arg4[%c0_26, %c0_27, %c0_28] : memref<1x8x128xf32, #tpu.memory_space<vmem>>, vector<1x8x128xf32>
    tpu.vector_store %arg4[%c0_26, %c0_27, %c0_28], %64 {strides = array<i32>} : memref<1x8x128xf32, #tpu.memory_space<vmem>>, vector<1x8x128xf32>,
    return
  }
  func.func @transform_0(%arg0: i32, %arg1: i32) -> (i32, i32) {
    %c0_i32 = arith.constant 0 : i32
    %c0_i32_0 = arith.constant 0 : i32
    %c0_i32_1 = arith.constant 0 : i32
    return %c0_i32, %c0_i32_0 : i32, i32
  }
  func.func @transform_1(%arg0: i32, %arg1: i32) -> (i32, i32) {
    %c1_i32 = arith.constant 1 : i32
    %0 = arith.muli %arg0, %c1_i32 : i32
    %1 = arith.addi %0, %arg1 : i32
    %c0_i32 = arith.constant 0 : i32
    %c0_i32_0 = arith.constant 0 : i32
    return %1, %c0_i32 : i32, i32
  }
  func.func @transform_2(%arg0: i32, %arg1: i32) -> (i32, i32, i32) {
    %c0_i32 = arith.constant 0 : i32
    %c0_i32_0 = arith.constant 0 : i32
    %c0_i32_1 = arith.constant 0 : i32
    return %arg0, %c0_i32, %c0_i32_0 : i32, i32, i32
  }
}

</mosaic_0001>

<llo_original>
// kernel: tpu_custom_call.1
$region0: #{tpu_custom_call.1}
  #allocation0 [shape = 'u32[]', space=smem, size = 0x4, offset = 0x4, fixed_abs, tag = 'smem constant byte address 0x4 - core index']
  #allocation1 [shape = 'u32[72,128]{1,0:T(1,128)}', space=vmem, size = 0x9000, scoped, tag = 'internal scratch']
  %s0 = inlined_call_operand.hbm [shape: f32[3,4], index: 0, kind: input, shape index: {}]
  %s1 = inlined_call_operand.hbm [shape: f32[16,128], index: 1, kind: input, shape index: {}]
  %s2 = inlined_call_operand.hbm [shape: f32[2,8,128], index: 2, kind: output, shape index: {}]
  %s3 = sld [smem:[#allocation0]]
  $region53: #{tpu_custom_call.1} parent=0
    _
  %s5 = ssub.s32 1, %s3
  %s6 = scalar_select 0, %s5, %s3
  $region1: #{tpu_custom_call.1} parent=0
    #allocation2 [shape = 'u8[2048]{0}', space=smem, size = 0x800, scoped, tag = 'input window, operand 0, single buffered']
    #allocation3 [shape = 's32[2]{0}', space=sflag, size = 0x8, scoped, tag = 'scoped memory for tpu_custom_call.1']
    #allocation4 [shape = 's32[2]{0}', space=sflag, size = 0x8, scoped, tag = 'scoped memory for tpu_custom_call.1']
    #allocation5 [shape = 's32[2]{0}', space=sflag, size = 0x8, scoped, tag = 'scoped memory for tpu_custom_call.1']
    #allocation6 [shape = 'u8[8192]{0}', space=vmem, size = 0x2000, scoped, tag = 'input window, operand 1']
    #allocation7 [shape = 'u8[8192]{0}', space=vmem, size = 0x2000, scoped, tag = 'output window, operand 0']
    %7 = vsyncpa [#allocation5], 0
    %8 = vsyncpa [#allocation3], 0
    %s9 = scalar_lea.sflag [#allocation3], 1
    %10 = vsyncpa %s9, 0
    %11 = vsyncpa [#allocation4], 0
    %s12 = scalar_lea.sflag [#allocation4], 1
    %13 = vsyncpa %s12, 0
    loop: start=0, step=1, limit=4
    $region2: #{tpu_custom_call.1} parent=1 // loop_pre_header
      _
    $region3: #{tpu_custom_call.1} parent=1 // loop_header
      %s15 = sphi 0, %s19
      %p16 = scmp.ge.s32.totalorder %s15, 4
      %s22 = sphi 0, %s34
      %s23 = sphi 0, %s30
      %s24 = sphi 0, %s22
      %s25 = sphi 0, %s23
      %s26 = sphi 0, %s24
      %s27 = sphi 0, %s25
      %s35 = sphi 0, %s35
      %s37 = sphi 0, %s35
      %s38 = sphi 0, %s37
      %s52 = sphi 0, %s38
      %s60 = sphi 0, %s62
      %s63 = sphi 0, %s60
      %s64 = sphi 0, %s63
      %s80 = sphi 0, %s64
      %s86 = sphi 0, %s88
      %s89 = sphi 0, %s86
      %s90 = sphi 0, %s89
      %s106 = sphi 0, %s90
    $region4: #{tpu_custom_call.1} parent=1 // loop_header_branch
      %18 = sbr.rel (%p16) target = $region8
    $region5: #{tpu_custom_call.1} parent=1 // loop_body
      %s20 = ssub.s32 %s15, 1
      %s21 = ssub.s32 %s15, 2
      %s28 = sadd.s32 1, %s23
      %p29 = scmp.ge.s32.totalorder %s28, 1
      %s30 = scalar_select %p29, 0, %s28
      %s31 = sadd.s32 1, %s22
      %s32 = scalar_select %p29, %s31, %s22
      %p33 = scmp.ge.s32.totalorder %s32, 2
      %s34 = scalar_select %p33, 0, %s32
      %s36 = sadd.s32 %s35, 1
      %p39 = scmp.eq.s32.totalorder %s15, 1
      %p40 = scmp.ne.s32.totalorder %s35, %s37
      %p41 = scmp.eq.s32.totalorder %s15, 0
      %p42 = por %p40, %p41
      %p43 = scmp.ne.s32.totalorder %s35, %s37
      %p44 = scmp.eq.s32.totalorder %s20, 1
      %p45 = por %p43, %p44
      %p46 = scmp.ne.s32.totalorder %s37, %s38
      %p47 = scmp.eq.s32.totalorder %s20, 0
      %p48 = por %p46, %p47
      %p49 = scmp.ne.s32.totalorder %s37, %s38
      %p50 = scmp.eq.s32.totalorder %s21, 1
      %p51 = por %p49, %p50
      %p53 = scmp.ne.s32.totalorder %s38, %s52
      %p54 = scmp.eq.s32.totalorder %s21, 0
      %p55 = por %p53, %p54
      %s56 = sadd.s32 %s22, %s23
      %s57 = sadd.s32 %s34, %s30
      %s58 = ssub.s32 %s56, %s57
      %p59 = scmp.eq.s32.totalorder %s58, 0
      %s61 = sadd.s32 %s60, 1
      %s62 = scalar_select %p59, %s60, %s61
      %p65 = pneg %p59
      %p66 = scmp.eq.s32.totalorder %s15, 1
      %p67 = por %p65, %p66
      %p68 = scmp.ne.s32.totalorder %s60, %s63
      %p69 = scmp.eq.s32.totalorder %s15, 0
      %p70 = por %p68, %p69
      %p71 = scmp.ne.s32.totalorder %s60, %s63
      %p72 = scmp.eq.s32.totalorder %s20, 1
      %p73 = por %p71, %p72
      %p74 = scmp.ne.s32.totalorder %s63, %s64
      %p75 = scmp.eq.s32.totalorder %s20, 0
      %p76 = por %p74, %p75
      %p77 = scmp.ne.s32.totalorder %s63, %s64
      %p78 = scmp.eq.s32.totalorder %s21, 1
      %p79 = por %p77, %p78
      %p81 = scmp.ne.s32.totalorder %s64, %s80
      %p82 = scmp.eq.s32.totalorder %s21, 0
      %p83 = por %p81, %p82
      %s84 = ssub.s32 %s22, %s34
      %p85 = scmp.eq.s32.totalorder %s84, 0
      %s87 = sadd.s32 %s86, 1
      %s88 = scalar_select %p85, %s86, %s87
      %p91 = pneg %p85
      %p92 = scmp.eq.s32.totalorder %s15, 1
      %p93 = por %p91, %p92
      %p94 = scmp.ne.s32.totalorder %s86, %s89
      %p95 = scmp.eq.s32.totalorder %s15, 0
      %p96 = por %p94, %p95
      %p97 = scmp.ne.s32.totalorder %s86, %s89
      %p98 = scmp.eq.s32.totalorder %s20, 1
      %p99 = por %p97, %p98
      %p100 = scmp.ne.s32.totalorder %s89, %s90
      %p101 = scmp.eq.s32.totalorder %s20, 0
      %p102 = por %p100, %p101
      %p103 = scmp.ne.s32.totalorder %s89, %s90
      %p104 = scmp.eq.s32.totalorder %s21, 1
      %p105 = por %p103, %p104
      %p107 = scmp.ne.s32.totalorder %s90, %s106
      %p108 = scmp.eq.s32.totalorder %s21, 0
      %p109 = por %p107, %p108
      %p110 = scmp.le.s32.totalorder 1, %s15
      %p111 = scmp.lt.s32.totalorder %s15, 3
      %p112 = pnand %p110, %p111
      %p113 = pneg %p112
      // Predicated region
      $region9: #{tpu_custom_call.1} parent=5 // pred_check
        _
      $region10: #{tpu_custom_call.1} parent=5 // pred_check_branch
        %115 = sbr.rel (%p112) target = $region12
      $region11: #{tpu_custom_call.1} parent=5 // pred_region
        %s116 = ssub.s32 %s15, 1
        // Predicated region
        $region13: #{tpu_custom_call.1} parent=11 // pred_check
          %p117 = pneg %p48
        $region14: #{tpu_custom_call.1} parent=11 // pred_check_branch
          %119 = sbr.rel (%p117) target = $region16
        $region15: #{tpu_custom_call.1} parent=11 // pred_region
          %121 = vsyncadd [#allocation5], 0
          %s123 = sshll.u32 %s0, 4
          %s124 = int_to_ptr.hbm [resolvable:$true] %s123
          %126 = dma.hbm_to_smem %s124, 64, [#allocation2], [#allocation5]
        $region16: #{tpu_custom_call.1} parent=11 // pred_fallthru
          _
      $region12: #{tpu_custom_call.1} parent=5 // pred_fallthru
        _
      %p127 = scmp.lt.s32.totalorder %s15, 2
      // Predicated region
      $region17: #{tpu_custom_call.1} parent=5 // pred_check
        %p128 = pneg %p127
      $region18: #{tpu_custom_call.1} parent=5 // pred_check_branch
        %130 = sbr.rel (%p128) target = $region20
      $region19: #{tpu_custom_call.1} parent=5 // pred_region
        // Predicated region
        $region21: #{tpu_custom_call.1} parent=19 // pred_check
          %p131 = pneg %p70
        $region22: #{tpu_custom_call.1} parent=19 // pred_check_branch
          %133 = sbr.rel (%p131) target = $region24
        $region23: #{tpu_custom_call.1} parent=19 // pred_region
          %s134 = sand.u32 %s60, 1
          %s135 = scalar_lea.sflag [#allocation3], %s134
          %s136 = sand.u32 %s60, 1
          %s137 = smul.addr %s136, 8
          %s138 = scalar_lea.vmem [#allocation6], %s137
          %s139 = sadd.s32 %s22, %s23
          %141 = vsyncadd %s135, 0
          %s142 = smul.addr %s139, 8
          %s143 = scalar_lea.hbm %s1, %s142
          %s145 = sshll.u32 %s143, 4
          %s146 = int_to_ptr.hbm [resolvable:$true] %s145
          %s147 = sshll.u32 %s138, 4
          %s148 = int_to_ptr.vmem [resolvable:$true] %s147
          %150 = dma.hbm_to_vmem [thread:$0]  %s146, 128, %s148, %s135
        $region24: #{tpu_custom_call.1} parent=19 // pred_fallthru
          _
      $region20: #{tpu_custom_call.1} parent=5 // pred_fallthru
        _
      %p151 = scmp.le.s32.totalorder 1, %s15
      %p152 = scmp.lt.s32.totalorder %s15, 3
      %p153 = pnand %p151, %p152
      %p154 = pneg %p153
      // Predicated region
      $region25: #{tpu_custom_call.1} parent=5 // pred_check
        _
      $region26: #{tpu_custom_call.1} parent=5 // pred_check_branch
        %156 = sbr.rel (%p153) target = $region28
      $region27: #{tpu_custom_call.1} parent=5 // pred_region
        %s157 = ssub.s32 %s15, 1
        // Predicated region
        $region29: #{tpu_custom_call.1} parent=27 // pred_check
          %p158 = pneg %p48
        $region30: #{tpu_custom_call.1} parent=27 // pred_check_branch
          %160 = sbr.rel (%p158) target = $region32
        $region31: #{tpu_custom_call.1} parent=27 // pred_region
          %162 = dma.done [#allocation5], 64
        $region32: #{tpu_custom_call.1} parent=27 // pred_fallthru
          _
        %s163 = sand.u32 %s63, 1
        %s164 = scalar_lea.sflag [#allocation3], %s163
        %s165 = sand.u32 %s63, 1
        %s166 = smul.addr %s165, 8
        %s167 = scalar_lea.vmem [#allocation6], %s166
        // Predicated region
        $region33: #{tpu_custom_call.1} parent=27 // pred_check
          %p168 = pneg %p76
        $region34: #{tpu_custom_call.1} parent=27 // pred_check_branch
          %170 = sbr.rel (%p168) target = $region36
        $region35: #{tpu_custom_call.1} parent=27 // pred_region
          %172 = dma.done %s164, 128
        $region36: #{tpu_custom_call.1} parent=27 // pred_fallthru
          _
        %173 = sfence
        %p174 = pneg %p48
        %p175 = pneg %p45
        %s176 = sand.u32 %s63, 1
        %s177 = scalar_lea.sflag [#allocation3], %s176
        %s178 = sand.u32 %s63, 1
        %s179 = smul.addr %s178, 8
        %s180 = scalar_lea.vmem [#allocation6], %s179
        %p181 = pneg %p76
        %p182 = pneg %p73
        %p183 = pneg %p102
        %p184 = pneg %p99
        %s185 = sand.u32 %s89, 1
        %s186 = scalar_lea.sflag [#allocation4], %s185
        %s187 = sand.u32 %s89, 1
        %s188 = smul.addr %s187, 8
        %s189 = scalar_lea.vmem [#allocation7], %s188
        %s190 = sadd.s32 %s24, %s25
        %p191 = scmp.eq.s32.totalorder %s25, 0
        // Predicated region
        $region37: #{tpu_custom_call.1} parent=27 // pred_check
          %p192 = pneg %p191
        $region38: #{tpu_custom_call.1} parent=27 // pred_check_branch
          %194 = sbr.rel (%p192) target = $region40
        $region39: #{tpu_custom_call.1} parent=27 // pred_region
          %195 = vst [vmem:[%s189] sm:$0xff] 0.0
        $region40: #{tpu_custom_call.1} parent=27 // pred_fallthru
          _
        %s196 = sld [smem:[#allocation2]]
        %s197 = sld [smem:[#allocation2 + $0x1]]
        %s198 = sld [smem:[#allocation2 + $0x2]]
        %s199 = sld [smem:[#allocation2 + $0x3]]
        %s200 = sld [smem:[#allocation2 + $0x80]]
        %s201 = sld [smem:[#allocation2 + $0x81]]
        %s202 = sld [smem:[#allocation2 + $0x82]]
        %s203 = sld [smem:[#allocation2 + $0x83]]
        %s204 = sld [smem:[#allocation2 + $0x100]]
        %s205 = sld [smem:[#allocation2 + $0x101]]
        %s206 = sld [smem:[#allocation2 + $0x102]]
        %s207 = sld [smem:[#allocation2 + $0x103]]
        %v208 = vld [vmem:[%s167] sm:$0xff]
        %v209 = vstv %s196
        %v210 = vsub.f32 %v208, %v209
        %v211 = vstv %s200
        %v212 = vmul.f32 %v210, %v211
        %v213 = vmul.f32 %v212, %v212
        %v214 = vstv %s204
        %v215 = vsub.f32 %v214, %v213
        %v216 = vstv %s197
        %v217 = vsub.f32 %v208, %v216
        %v218 = vstv %s201
        %v219 = vmul.f32 %v217, %v218
        %v220 = vmul.f32 %v219, %v219
        %v221 = vstv %s205
        %v222 = vsub.f32 %v221, %v220
        %v223 = vstv %s198
        %v224 = vsub.f32 %v208, %v223
        %v225 = vstv %s202
        %v226 = vmul.f32 %v224, %v225
        %v227 = vmul.f32 %v226, %v226
        %v228 = vstv %s206
        %v229 = vsub.f32 %v228, %v227
        %v230 = vstv %s199
        %v231 = vsub.f32 %v208, %v230
        %v232 = vstv %s203
        %v233 = vmul.f32 %v231, %v232
        %v234 = vmul.f32 %v233, %v233
        %v235 = vstv %s207
        %v236 = vsub.f32 %v235, %v234
        %v237 = vmax.f32 %v215, %v222
        %v238 = vmax.f32 %v237, %v229
        %v239 = vmax.f32 %v238, %v236
        %v240 = vsub.f32 %v215, %v239
        %v241 = vmul.f32 %v240, 1.442695
        %v242 = vpow.pop %v241
        %v243 = vsub.f32 %v222, %v239
        %v244 = vmul.f32 %v243, 1.442695
        %v245 = vpow.pop %v244
        %v246 = vadd.f32 %v242, %v245
        %v247 = vsub.f32 %v229, %v239
        %v248 = vmul.f32 %v247, 1.442695
        %v249 = vpow.pop %v248
        %v250 = vadd.f32 %v246, %v249
        %v251 = vsub.f32 %v236, %v239
        %v252 = vmul.f32 %v251, 1.442695
        %v253 = vpow.pop %v252
        %v254 = vadd.f32 %v250, %v253
        %v255 = vlog2.pop %v254
        %v256 = vmul.f32 %v255, 0.6931472
        %v257 = vadd.f32 %v239, %v256
        %v258 = vadd.f32 %v257, 0.0
        %v259 = vld [vmem:[%s189] sm:$0xff]
        %v260 = vadd.f32 %v259, %v258
        %261 = vst [vmem:[%s189] sm:$0xff] %v260
        %s262 = sand.u32 %s89, 1
        %s263 = scalar_lea.sflag [#allocation4], %s262
        %s264 = sand.u32 %s89, 1
        %s265 = smul.addr %s264, 8
        %s266 = scalar_lea.vmem [#allocation7], %s265
        // Predicated region
        $region41: #{tpu_custom_call.1} parent=27 // pred_check
          %p267 = pneg %p99
        $region42: #{tpu_custom_call.1} parent=27 // pred_check_branch
          %269 = sbr.rel (%p267) target = $region44
        $region43: #{tpu_custom_call.1} parent=27 // pred_region
          %271 = vsyncadd %s263, 0
          %s272 = smul.addr %s24, 8
          %s273 = scalar_lea.hbm %s2, %s272
          %s275 = sshll.u32 %s266, 4
          %s276 = int_to_ptr.vmem [resolvable:$true] %s275
          %s277 = sshll.u32 %s273, 4
          %s278 = int_to_ptr.hbm [resolvable:$true] %s277
          %280 = dma.vmem_to_hbm [thread:$0]  %s276, 128, %s278, %s263
        $region44: #{tpu_custom_call.1} parent=27 // pred_fallthru
          _
      $region28: #{tpu_custom_call.1} parent=5 // pred_fallthru
        _
      %p281 = scmp.le.s32.totalorder 2, %s15
      // Predicated region
      $region45: #{tpu_custom_call.1} parent=5 // pred_check
        %p282 = pneg %p281
      $region46: #{tpu_custom_call.1} parent=5 // pred_check_branch
        %284 = sbr.rel (%p282) target = $region48
      $region47: #{tpu_custom_call.1} parent=5 // pred_region
        %s285 = ssub.s32 %s15, 2
        // Predicated region
        $region49: #{tpu_custom_call.1} parent=47 // pred_check
          %p286 = pneg %p105
        $region50: #{tpu_custom_call.1} parent=47 // pred_check_branch
          %288 = sbr.rel (%p286) target = $region52
        $region51: #{tpu_custom_call.1} parent=47 // pred_region
          %s289 = sand.u32 %s90, 1
          %s290 = scalar_lea.sflag [#allocation4], %s289
          %s291 = sand.u32 %s90, 1
          %s292 = smul.addr %s291, 8
          %s293 = scalar_lea.vmem [#allocation7], %s292
          %295 = dma.done %s290, 128
        $region52: #{tpu_custom_call.1} parent=47 // pred_fallthru
          _
      $region48: #{tpu_custom_call.1} parent=5 // pred_fallthru
        _
    $region6: #{tpu_custom_call.1} parent=1 // loop_footer
      %s19 = sadd.s32 1, %s15
    $region7: #{tpu_custom_call.1} parent=1 // loop_footer_branch
      %14 = sbr.rel target = $region3
    $region8: #{tpu_custom_call.1} parent=1 // loop_exit
      _
    %296 = vsyncpa [#allocation3], 1
    %s297 = scalar_lea.sflag [#allocation3], 1
    %298 = vsyncpa %s297, 1
    %299 = vsyncpa [#allocation4], 1
    %s300 = scalar_lea.sflag [#allocation4], 1
    %301 = vsyncpa %s300, 1
    %302 = vsyncpa [#allocation5], 1
    %s303 = scalar_lea.sflag [#allocation5], 1
    %304 = vsyncpa %s303, 1

</llo_original>
